<compile_context>
chip_gen: v7x
topology: tpu7x:2x2x1
jax: 0.10.0
libtpu: 0.0.40
codegen_flags: <defaults>
</compile_context>

<pallas_src>
import functools

import jax
import jax.numpy as jnp
from jax.experimental import pallas as pl
from jax.experimental.pallas import tpu as pltpu

LANE = 128        # TPU lane width; every feature dim is zero-padded to this.
NUM_LAYERS = 6    # fc6, fc7, fc8, fc9, fc10, fc11


def _leaky_relu(x, negative_slope=0.01):
    return jnp.where(x > 0, x, negative_slope * x)


def _round_up(x, m):
    return (x + m - 1) // m * m


def critic_kernel(state_ref, action_ref, w_ref, b_ref, out_ref):
    """One batch tile of the full Critic MLP.

    state_ref:  (TILE_B, 128) bf16  -- state zero-padded to 128 lanes
    action_ref: (TILE_B, 128) bf16  -- action placed at columns [fc6:fc6+A], else 0
    w_ref:      (6, 128, 128) bf16  -- zero-padded (in, out) weights per layer
    b_ref:      (6, 1, 128)   f32   -- zero-padded biases per layer
    out_ref:    (TILE_B, 128) f32   -- q in column 0, zeros elsewhere (lane-dense)
    """
    f32 = jnp.float32
    bf16 = jnp.bfloat16

    def dense(x_bf16, layer):
        # `layer` is a static Python int -> zero-cost static slices of the
        # packed parameter buffers.
        w = w_ref[layer]                 # (128, 128) bf16
        b = b_ref[layer]                 # (1, 128)   f32
        return jnp.dot(x_bf16, w, preferred_element_type=f32) + b

    # fc6 (padded columns of the result are exactly 0: zero weights, zero bias)
    xs = _leaky_relu(dense(state_ref[...], 0))                     # f32
    # cat((xs, action), dim=1): xs occupies cols [0:fc6], action_ref occupies
    # cols [fc6:fc6+A]; the columns are disjoint so concat == elementwise add.
    x = (xs + action_ref[...].astype(f32)).astype(bf16)
    # fc7 .. fc10
    x = _leaky_relu(dense(x, 1)).astype(bf16)
    x = _leaky_relu(dense(x, 2)).astype(bf16)
    x = _leaky_relu(dense(x, 3)).astype(bf16)
    x = _leaky_relu(dense(x, 4)).astype(bf16)
    # fc11: output dim padded to 128 -> full-lane unmasked store; q is column 0.
    out_ref[...] = dense(x, 5)


@functools.partial(jax.jit, static_argnames=("state_size", "action_size", "fc6"))
def critic_forward(state, action, w_packed, b_packed, *,
                   state_size, action_size, fc6):
    """Runs the Pallas Critic forward and returns q of shape (B, 1), f32."""
    assert fc6 + action_size <= LANE, "fc6 + action_size must fit in 128 lanes"
    B = state.shape[0]
    # Batch tile: multiple of 8 sublanes, capped so double-buffered tiles stay
    # tiny in VMEM even on v7x (64 MiB).
    tile_b = min(1024, _round_up(B, 8))
    b_pad = _round_up(B, tile_b)
    grid = (b_pad // tile_b,)

    bf16 = jnp.bfloat16
    state_p = (jnp.zeros((b_pad, LANE), bf16)
               .at[:B, :state_size].set(state.astype(bf16)))
    action_p = (jnp.zeros((b_pad, LANE), bf16)
                .at[:B, fc6:fc6 + action_size].set(action.astype(bf16)))

    batch_spec = pl.BlockSpec((tile_b, LANE), lambda i: (i, 0))
    w_spec = pl.BlockSpec((NUM_LAYERS, LANE, LANE), lambda i: (0, 0, 0))
    b_spec = pl.BlockSpec((NUM_LAYERS, 1, LANE), lambda i: (0, 0, 0))

    out = pl.pallas_call(
        critic_kernel,
        out_shape=jax.ShapeDtypeStruct((b_pad, LANE), jnp.float32),
        grid_spec=pltpu.PrefetchScalarGridSpec(
            num_scalar_prefetch=0,
            grid=grid,
            in_specs=[batch_spec, batch_spec, w_spec, b_spec],
            out_specs=batch_spec,
        ),
        compiler_params=pltpu.CompilerParams(
            dimension_semantics=("parallel",),
        ),
    )(state_p, action_p, w_packed, b_packed)
    return out[:B, 0:1]


def init_params(key, state_size, action_size, fc6, fc7, fc8, fc9, fc10, fc11):
    """Deterministic parameter init mirroring the PyTorch reset_parameters().

    hidden_init() in the reference uses weight.size()[0] == out_features as the
    "fan_in", so lim = 1/sqrt(out_features) for fc6..fc10; fc11 uses +/-0.003.
    Biases keep PyTorch's default Linear init: U(-1/sqrt(in), 1/sqrt(in)).
    Weights are stored transposed, as (in_features, out_features).
    """
    def linear(key, in_f, out_f, w_lim):
        kw, kb = jax.random.split(key)
        w = jax.random.uniform(kw, (in_f, out_f), jnp.float32, -w_lim, w_lim)
        b_lim = 1.0 / jnp.sqrt(jnp.float32(in_f))
        b = jax.random.uniform(kb, (1, out_f), jnp.float32, -b_lim, b_lim)
        return w, b

    keys = jax.random.split(key, 6)
    w6, b6 = linear(keys[0], state_size, fc6, 1.0 / jnp.sqrt(jnp.float32(fc6)))
    w7, b7 = linear(keys[1], fc6 + action_size, fc7, 1.0 / jnp.sqrt(jnp.float32(fc7)))
    w8, b8 = linear(keys[2], fc7, fc8, 1.0 / jnp.sqrt(jnp.float32(fc8)))
    w9, b9 = linear(keys[3], fc8, fc9, 1.0 / jnp.sqrt(jnp.float32(fc9)))
    w10, b10 = linear(keys[4], fc9, fc10, 1.0 / jnp.sqrt(jnp.float32(fc10)))
    w11, b11 = linear(keys[5], fc11, 1, 0.003)   # fc11's in_features == fc10

    return {"w6": w6, "b6": b6, "w7": w7, "b7": b7, "w8": w8, "b8": b8,
            "w9": w9, "b9": b9, "w10": w10, "b10": b10, "w11": w11, "b11": b11}


def pack_params(params):
    """Pack all weights/biases into two lane-padded buffers.

    Weights -> (6, 128, 128) bf16, biases -> (6, 1, 128) f32, zero-padded.
    Because the action is placed at input columns [fc6:fc6+A] (matching W7's row
    layout for the concat), W7 packs with a straight zero-pad.
    """
    order = [("w6", "b6"), ("w7", "b7"), ("w8", "b8"),
             ("w9", "b9"), ("w10", "b10"), ("w11", "b11")]
    ws, bs = [], []
    for wn, bn in order:
        w, b = params[wn], params[bn]
        assert w.shape[0] <= LANE and w.shape[1] <= LANE, w.shape
        wp = jnp.zeros((LANE, LANE), jnp.float32).at[:w.shape[0], :w.shape[1]].set(w)
        bp = jnp.zeros((1, LANE), jnp.float32).at[:, :b.shape[1]].set(b)
        ws.append(wp)
        bs.append(bp)
    w_packed = jnp.stack(ws).astype(jnp.bfloat16)   # (6, 128, 128) bf16
    b_packed = jnp.stack(bs)                        # (6, 1, 128)  f32
    return w_packed, b_packed


def reference_forward(state, action, params):
    """Pure-JAX reference mirroring the kernel's bf16-in / f32-accumulate math."""
    bf16, f32 = jnp.bfloat16, jnp.float32

    def dense(x, w, b):
        return jnp.dot(x.astype(bf16), w.astype(bf16),
                       preferred_element_type=f32) + b

    xs = _leaky_relu(dense(state, params["w6"], params["b6"]))
    x = jnp.concatenate([xs, action], axis=1)
    x = _leaky_relu(dense(x, params["w7"], params["b7"]))
    x = _leaky_relu(dense(x, params["w8"], params["b8"]))
    x = _leaky_relu(dense(x, params["w9"], params["b9"]))
    x = _leaky_relu(dense(x, params["w10"], params["b10"]))
    return dense(x, params["w11"], params["b11"])


if __name__ == "__main__":
    # Small shapes consistent with the module (layer_critic == 1 path).
    B = 8
    state_size, action_size = 32, 8
    fc6, fc7, fc8, fc9, fc10 = 64, 64, 32, 32, 32
    fc11 = fc10  # fc11's input dim must equal fc10's output dim for forward()

    key = jax.random.PRNGKey(0)
    k_state, k_action, k_params = jax.random.split(key, 3)
    state = jax.random.normal(k_state, (B, state_size), jnp.float32)
    action = jax.random.normal(k_action, (B, action_size), jnp.float32)
    params = init_params(k_params, state_size, action_size,
                         fc6, fc7, fc8, fc9, fc10, fc11)
    w_packed, b_packed = pack_params(params)

    q = critic_forward(state, action, w_packed, b_packed,
                       state_size=state_size, action_size=action_size, fc6=fc6)
    q = jax.block_until_ready(q)

    q_ref = reference_forward(state, action, params)
    assert q.shape == (B, 1), q.shape
    assert jnp.allclose(q, q_ref, atol=1e-4, rtol=1e-4), "mismatch vs reference"

    print("KERNEL_OK")
</pallas_src>

<mosaic_0001>
module attributes {stable_mosaic.version = 11 : i64} {
  func.func @critic_kernel(%arg0: i32, %arg1: memref<8x128xbf16, #tpu.memory_space<vmem>>, %arg2: memref<8x128xbf16, #tpu.memory_space<vmem>>, %arg3: memref<6x128x128xbf16, #tpu.memory_space<vmem>>, %arg4: memref<6x1x128xf32, #tpu.memory_space<vmem>>, %arg5: memref<8x128xf32, #tpu.memory_space<vmem>>) attributes {dimension_semantics = [#tpu.dimension_semantics<parallel>], iteration_bounds = array<i64: 1>, scalar_prefetch = 0 : i64, scratch_operands = 0 : i64, tpu.core_type = #tpu.core_type<tc>, window_params = [{transform_indices = @transform_0, window_bounds = array<i64: 8, 128>}, {transform_indices = @transform_1, window_bounds = array<i64: 8, 128>}, {pipeline_mode = #tpu.pipeline_mode<synchronous>, transform_indices = @transform_2, window_bounds = array<i64: 6, 128, 128>}, {pipeline_mode = #tpu.pipeline_mode<synchronous>, transform_indices = @transform_3, window_bounds = array<i64: 6, 1, 128>}, {transform_indices = @transform_4, window_bounds = array<i64: 8, 128>}]} {
    %c0 = arith.constant 0 : index
    %c0_0 = arith.constant 0 : index
    %0 = vector.load %arg1[%c0, %c0_0] : memref<8x128xbf16, #tpu.memory_space<vmem>>, vector<8x128xbf16>
    %c0_1 = arith.constant 0 : index
    %c0_2 = arith.constant 0 : index
    %c0_3 = arith.constant 0 : index
    %1 = vector.load %arg3[%c0_1, %c0_2, %c0_3] : memref<6x128x128xbf16, #tpu.memory_space<vmem>>, vector<1x128x128xbf16>
    %2 = vector.shape_cast %1 : vector<1x128x128xbf16> to vector<128x128xbf16>
    %c0_4 = arith.constant 0 : index
    %c0_5 = arith.constant 0 : index
    %c0_6 = arith.constant 0 : index
    %3 = vector.load %arg4[%c0_4, %c0_5, %c0_6] : memref<6x1x128xf32, #tpu.memory_space<vmem>>, vector<1x1x128xf32>
    %4 = vector.shape_cast %3 : vector<1x1x128xf32> to vector<1x128xf32>
    %cst = arith.constant dense<0.000000e+00> : vector<8x128xf32>
    %5 = tpu.matmul %0, %2, %cst {dimension_numbers = #tpu.dot_dimension_numbers<[1], [0], [0], [1], [0, 0, 1, 1], [], []>} : vector<8x128xbf16>, vector<128x128xbf16>, vector<8x128xf32> -> vector<8x128xf32>
    %6 = vector.broadcast %4 : vector<1x128xf32> to vector<8x128xf32>
    %7 = arith.addf %5, %6 : vector<8x128xf32>
    %cst_7 = arith.constant 0.000000e+00 : f32
    %8 = vector.broadcast %cst_7 : f32 to vector<8x128xf32>
    %9 = arith.cmpf ogt, %7, %8 : vector<8x128xf32>
    %cst_8 = arith.constant 0.00999999977 : f32
    %10 = vector.broadcast %cst_8 : f32 to vector<8x128xf32>
    %11 = arith.mulf %10, %7 : vector<8x128xf32>
    %12 = arith.select %9, %7, %11 : vector<8x128xi1>, vector<8x128xf32>
    %c0_9 = arith.constant 0 : index
    %c0_10 = arith.constant 0 : index
    %13 = vector.load %arg2[%c0_9, %c0_10] : memref<8x128xbf16, #tpu.memory_space<vmem>>, vector<8x128xbf16>
    %14 = arith.extf %13 : vector<8x128xbf16> to vector<8x128xf32>
    %15 = arith.addf %12, %14 : vector<8x128xf32>
    %16 = arith.truncf %15 : vector<8x128xf32> to vector<8x128xbf16>
    %c1 = arith.constant 1 : index
    %c0_11 = arith.constant 0 : index
    %c0_12 = arith.constant 0 : index
    %17 = vector.load %arg3[%c1, %c0_11, %c0_12] : memref<6x128x128xbf16, #tpu.memory_space<vmem>>, vector<1x128x128xbf16>
    %18 = vector.shape_cast %17 : vector<1x128x128xbf16> to vector<128x128xbf16>
    %c1_13 = arith.constant 1 : index
    %c0_14 = arith.constant 0 : index
    %c0_15 = arith.constant 0 : index
    %19 = vector.load %arg4[%c1_13, %c0_14, %c0_15] : memref<6x1x128xf32, #tpu.memory_space<vmem>>, vector<1x1x128xf32>
    %20 = vector.shape_cast %19 : vector<1x1x128xf32> to vector<1x128xf32>
    %cst_16 = arith.constant dense<0.000000e+00> : vector<8x128xf32>
    %21 = tpu.matmul %16, %18, %cst_16 {dimension_numbers = #tpu.dot_dimension_numbers<[1], [0], [0], [1], [0, 0, 1, 1], [], []>} : vector<8x128xbf16>, vector<128x128xbf16>, vector<8x128xf32> -> vector<8x128xf32>
    %22 = vector.broadcast %20 : vector<1x128xf32> to vector<8x128xf32>
    %23 = arith.addf %21, %22 : vector<8x128xf32>
    %cst_17 = arith.constant 0.000000e+00 : f32
    %24 = vector.broadcast %cst_17 : f32 to vector<8x128xf32>
    %25 = arith.cmpf ogt, %23, %24 : vector<8x128xf32>
    %cst_18 = arith.constant 0.00999999977 : f32
    %26 = vector.broadcast %cst_18 : f32 to vector<8x128xf32>
    %27 = arith.mulf %26, %23 : vector<8x128xf32>
    %28 = arith.select %25, %23, %27 : vector<8x128xi1>, vector<8x128xf32>
    %29 = arith.truncf %28 : vector<8x128xf32> to vector<8x128xbf16>
    %c2 = arith.constant 2 : index
    %c0_19 = arith.constant 0 : index
    %c0_20 = arith.constant 0 : index
    %30 = vector.load %arg3[%c2, %c0_19, %c0_20] : memref<6x128x128xbf16, #tpu.memory_space<vmem>>, vector<1x128x128xbf16>
    %31 = vector.shape_cast %30 : vector<1x128x128xbf16> to vector<128x128xbf16>
    %c2_21 = arith.constant 2 : index
    %c0_22 = arith.constant 0 : index
    %c0_23 = arith.constant 0 : index
    %32 = vector.load %arg4[%c2_21, %c0_22, %c0_23] : memref<6x1x128xf32, #tpu.memory_space<vmem>>, vector<1x1x128xf32>
    %33 = vector.shape_cast %32 : vector<1x1x128xf32> to vector<1x128xf32>
    %cst_24 = arith.constant dense<0.000000e+00> : vector<8x128xf32>
    %34 = tpu.matmul %29, %31, %cst_24 {dimension_numbers = #tpu.dot_dimension_numbers<[1], [0], [0], [1], [0, 0, 1, 1], [], []>} : vector<8x128xbf16>, vector<128x128xbf16>, vector<8x128xf32> -> vector<8x128xf32>
    %35 = vector.broadcast %33 : vector<1x128xf32> to vector<8x128xf32>
    %36 = arith.addf %34, %35 : vector<8x128xf32>
    %cst_25 = arith.constant 0.000000e+00 : f32
    %37 = vector.broadcast %cst_25 : f32 to vector<8x128xf32>
    %38 = arith.cmpf ogt, %36, %37 : vector<8x128xf32>
    %cst_26 = arith.constant 0.00999999977 : f32
    %39 = vector.broadcast %cst_26 : f32 to vector<8x128xf32>
    %40 = arith.mulf %39, %36 : vector<8x128xf32>
    %41 = arith.select %38, %36, %40 : vector<8x128xi1>, vector<8x128xf32>
    %42 = arith.truncf %41 : vector<8x128xf32> to vector<8x128xbf16>
    %c3 = arith.constant 3 : index
    %c0_27 = arith.constant 0 : index
    %c0_28 = arith.constant 0 : index
    %43 = vector.load %arg3[%c3, %c0_27, %c0_28] : memref<6x128x128xbf16, #tpu.memory_space<vmem>>, vector<1x128x128xbf16>
    %44 = vector.shape_cast %43 : vector<1x128x128xbf16> to vector<128x128xbf16>
    %c3_29 = arith.constant 3 : index
    %c0_30 = arith.constant 0 : index
    %c0_31 = arith.constant 0 : index
    %45 = vector.load %arg4[%c3_29, %c0_30, %c0_31] : memref<6x1x128xf32, #tpu.memory_space<vmem>>, vector<1x1x128xf32>
    %46 = vector.shape_cast %45 : vector<1x1x128xf32> to vector<1x128xf32>
    %cst_32 = arith.constant dense<0.000000e+00> : vector<8x128xf32>
    %47 = tpu.matmul %42, %44, %cst_32 {dimension_numbers = #tpu.dot_dimension_numbers<[1], [0], [0], [1], [0, 0, 1, 1], [], []>} : vector<8x128xbf16>, vector<128x128xbf16>, vector<8x128xf32> -> vector<8x128xf32>
    %48 = vector.broadcast %46 : vector<1x128xf32> to vector<8x128xf32>
    %49 = arith.addf %47, %48 : vector<8x128xf32>
    %cst_33 = arith.constant 0.000000e+00 : f32
    %50 = vector.broadcast %cst_33 : f32 to vector<8x128xf32>
    %51 = arith.cmpf ogt, %49, %50 : vector<8x128xf32>
    %cst_34 = arith.constant 0.00999999977 : f32
    %52 = vector.broadcast %cst_34 : f32 to vector<8x128xf32>
    %53 = arith.mulf %52, %49 : vector<8x128xf32>
    %54 = arith.select %51, %49, %53 : vector<8x128xi1>, vector<8x128xf32>
    %55 = arith.truncf %54 : vector<8x128xf32> to vector<8x128xbf16>
    %c4 = arith.constant 4 : index
    %c0_35 = arith.constant 0 : index
    %c0_36 = arith.constant 0 : index
    %56 = vector.load %arg3[%c4, %c0_35, %c0_36] : memref<6x128x128xbf16, #tpu.memory_space<vmem>>, vector<1x128x128xbf16>
    %57 = vector.shape_cast %56 : vector<1x128x128xbf16> to vector<128x128xbf16>
    %c4_37 = arith.constant 4 : index
    %c0_38 = arith.constant 0 : index
    %c0_39 = arith.constant 0 : index
    %58 = vector.load %arg4[%c4_37, %c0_38, %c0_39] : memref<6x1x128xf32, #tpu.memory_space<vmem>>, vector<1x1x128xf32>
    %59 = vector.shape_cast %58 : vector<1x1x128xf32> to vector<1x128xf32>
    %cst_40 = arith.constant dense<0.000000e+00> : vector<8x128xf32>
    %60 = tpu.matmul %55, %57, %cst_40 {dimension_numbers = #tpu.dot_dimension_numbers<[1], [0], [0], [1], [0, 0, 1, 1], [], []>} : vector<8x128xbf16>, vector<128x128xbf16>, vector<8x128xf32> -> vector<8x128xf32>
    %61 = vector.broadcast %59 : vector<1x128xf32> to vector<8x128xf32>
    %62 = arith.addf %60, %61 : vector<8x128xf32>
    %cst_41 = arith.constant 0.000000e+00 : f32
    %63 = vector.broadcast %cst_41 : f32 to vector<8x128xf32>
    %64 = arith.cmpf ogt, %62, %63 : vector<8x128xf32>
    %cst_42 = arith.constant 0.00999999977 : f32
    %65 = vector.broadcast %cst_42 : f32 to vector<8x128xf32>
    %66 = arith.mulf %65, %62 : vector<8x128xf32>
    %67 = arith.select %64, %62, %66 : vector<8x128xi1>, vector<8x128xf32>
    %68 = arith.truncf %67 : vector<8x128xf32> to vector<8x128xbf16>
    %c5 = arith.constant 5 : index
    %c0_43 = arith.constant 0 : index
    %c0_44 = arith.constant 0 : index
    %69 = vector.load %arg3[%c5, %c0_43, %c0_44] : memref<6x128x128xbf16, #tpu.memory_space<vmem>>, vector<1x128x128xbf16>
    %70 = vector.shape_cast %69 : vector<1x128x128xbf16> to vector<128x128xbf16>
    %c5_45 = arith.constant 5 : index
    %c0_46 = arith.constant 0 : index
    %c0_47 = arith.constant 0 : index
    %71 = vector.load %arg4[%c5_45, %c0_46, %c0_47] : memref<6x1x128xf32, #tpu.memory_space<vmem>>, vector<1x1x128xf32>
    %72 = vector.shape_cast %71 : vector<1x1x128xf32> to vector<1x128xf32>
    %cst_48 = arith.constant dense<0.000000e+00> : vector<8x128xf32>
    %73 = tpu.matmul %68, %70, %cst_48 {dimension_numbers = #tpu.dot_dimension_numbers<[1], [0], [0], [1], [0, 0, 1, 1], [], []>} : vector<8x128xbf16>, vector<128x128xbf16>, vector<8x128xf32> -> vector<8x128xf32>
    %74 = vector.broadcast %72 : vector<1x128xf32> to vector<8x128xf32>
    %75 = arith.addf %73, %74 : vector<8x128xf32>
    %c0_49 = arith.constant 0 : index
    %c0_50 = arith.constant 0 : index
    %76 = vector.load %arg5[%c0_49, %c0_50] : memref<8x128xf32, #tpu.memory_space<vmem>>, vector<8x128xf32>
    tpu.vector_store %arg5[%c0_49, %c0_50], %75 {strides = array<i32>} : memref<8x128xf32, #tpu.memory_space<vmem>>, vector<8x128xf32>,
    return
  }
  func.func @transform_0(%arg0: i32) -> (i32, i32) {
    %c0_i32 = arith.constant 0 : i32
    %c0_i32_0 = arith.constant 0 : i32
    return %arg0, %c0_i32 : i32, i32
  }
  func.func @transform_1(%arg0: i32) -> (i32, i32) {
    %c0_i32 = arith.constant 0 : i32
    %c0_i32_0 = arith.constant 0 : i32
    return %arg0, %c0_i32 : i32, i32
  }
  func.func @transform_2(%arg0: i32) -> (i32, i32, i32) {
    %c0_i32 = arith.constant 0 : i32
    %c0_i32_0 = arith.constant 0 : i32
    %c0_i32_1 = arith.constant 0 : i32
    %c0_i32_2 = arith.constant 0 : i32
    return %c0_i32, %c0_i32_0, %c0_i32_1 : i32, i32, i32
  }
  func.func @transform_3(%arg0: i32) -> (i32, i32, i32) {
    %c0_i32 = arith.constant 0 : i32
    %c0_i32_0 = arith.constant 0 : i32
    %c0_i32_1 = arith.constant 0 : i32
    %c0_i32_2 = arith.constant 0 : i32
    return %c0_i32, %c0_i32_0, %c0_i32_1 : i32, i32, i32
  }
  func.func @transform_4(%arg0: i32) -> (i32, i32) {
    %c0_i32 = arith.constant 0 : i32
    %c0_i32_0 = arith.constant 0 : i32
    return %arg0, %c0_i32 : i32, i32
  }
}

</mosaic_0001>

<llo_original>
// kernel: critic_forward.1
$region0: #{critic_forward.1}
  #allocation0 [shape = 'u32[]', space=smem, size = 0x4, offset = 0x4, fixed_abs, tag = 'smem constant byte address 0x4 - core index']
  #allocation1 [shape = 'u32[144,128]{1,0:T(1,128)}', space=vmem, size = 0x12000, scoped, tag = 'internal scratch']
  %s0 = inlined_call_operand.vmem [shape: bf16[8,128], index: 0, kind: input, shape index: {}]
  %s1 = inlined_call_operand.vmem [shape: bf16[8,128], index: 1, kind: input, shape index: {}]
  %s2 = inlined_call_operand.hbm [shape: bf16[6,128,128], index: 2, kind: input, shape index: {}]
  %s3 = inlined_call_operand.vmem [shape: f32[6,1,128], index: 3, kind: input, shape index: {}]
  %s4 = inlined_call_operand.vmem [shape: f32[8,128], index: 4, kind: output, shape index: {}]
  %s5 = sld [smem:[#allocation0]]
  $region30: #{critic_forward.1} parent=0
    _
  %s7 = ssub.s32 1, %s5
  %s8 = scalar_select 0, %s7, %s5
  $region1: #{critic_forward.1} parent=0
    #allocation2 [shape = 'u8[196608]{0}', space=vmem, size = 0x30000, scoped, tag = 'input window, operand 2, single buffered']
    #allocation3 [shape = 's32[1]{0}', space=sflag, size = 0x4, scoped, tag = 'scoped memory for critic_forward.1']
    %9 = vsyncpa [#allocation3], 0
    // Predicated region
    $region2: #{critic_forward.1} parent=1 // pred_check
      _
    $region3: #{critic_forward.1} parent=1 // pred_check_branch
      %11 = sbr.rel (0) target = $region5
    $region4: #{critic_forward.1} parent=1 // pred_region
      _
    $region5: #{critic_forward.1} parent=1 // pred_fallthru
      _
    // Predicated region
    $region6: #{critic_forward.1} parent=1 // pred_check
      _
    $region7: #{critic_forward.1} parent=1 // pred_check_branch
      %13 = sbr.rel (0) target = $region9
    $region8: #{critic_forward.1} parent=1 // pred_region
      _
    $region9: #{critic_forward.1} parent=1 // pred_fallthru
      _
    // Predicated region
    $region10: #{critic_forward.1} parent=1 // pred_check
      _
    $region11: #{critic_forward.1} parent=1 // pred_check_branch
      %15 = sbr.rel (0) target = $region13
    $region12: #{critic_forward.1} parent=1 // pred_region
      %s17 = ssub.s32 6144, 6144
      %18 = vsyncadd [#allocation3], %s17
      %s19 = sshll.u32 [#allocation2], 4
      %s20 = int_to_ptr.vmem [resolvable:$true] %s19
      %25 = dma.hbm_to_vmem [thread:$0]  %s2, 6144, %s20, [#allocation3], 64, 64, 4
    $region13: #{critic_forward.1} parent=1 // pred_fallthru
      _
    // Predicated region
    $region14: #{critic_forward.1} parent=1 // pred_check
      _
    $region15: #{critic_forward.1} parent=1 // pred_check_branch
      %27 = sbr.rel (0) target = $region17
    $region16: #{critic_forward.1} parent=1 // pred_region
      _
    $region17: #{critic_forward.1} parent=1 // pred_fallthru
      _
    // Predicated region
    $region18: #{critic_forward.1} parent=1 // pred_check
      _
    $region19: #{critic_forward.1} parent=1 // pred_check_branch
      %29 = sbr.rel (0) target = $region21
    $region20: #{critic_forward.1} parent=1 // pred_region
      %30 = dma.done [#allocation3], 6144
    $region21: #{critic_forward.1} parent=1 // pred_fallthru
      _
    %v32 = vld [vmem:[%s0] sm:$0xf]
    %v33 = vld [vmem:[#allocation2] sm:$0xf]
    %v34 = vld [vmem:[#allocation2 + $0x4] sm:$0xf]
    %v35 = vld [vmem:[#allocation2 + $0x8] sm:$0xf]
    %v36 = vld [vmem:[#allocation2 + $0xc] sm:$0xf]
    %v37 = vld [vmem:[#allocation2 + $0x10] sm:$0xf]
    %v38 = vld [vmem:[#allocation2 + $0x14] sm:$0xf]
    %v39 = vld [vmem:[#allocation2 + $0x18] sm:$0xf]
    %v40 = vld [vmem:[#allocation2 + $0x1c] sm:$0xf]
    %v41 = vld [vmem:[#allocation2 + $0x20] sm:$0xf]
    %v42 = vld [vmem:[#allocation2 + $0x24] sm:$0xf]
    %v43 = vld [vmem:[#allocation2 + $0x28] sm:$0xf]
    %v44 = vld [vmem:[#allocation2 + $0x2c] sm:$0xf]
    %v45 = vld [vmem:[#allocation2 + $0x30] sm:$0xf]
    %v46 = vld [vmem:[#allocation2 + $0x34] sm:$0xf]
    %v47 = vld [vmem:[#allocation2 + $0x38] sm:$0xf]
    %v48 = vld [vmem:[#allocation2 + $0x3c] sm:$0xf]
    %v49 = vld [vmem:[%s3] sm:$0x1]
    %v51 = vlaneseq
    %v52 = vshrl.u32 %v51, 7
    %v53 = vsub.s32 0, %v52
    %v54 = vrot.slane %v49, %v53
    %v72 = vunpack.c.l.b16 %v33
    %v73 = vunpack.c.l.b16 %v34
    %v74 = vunpack.c.l.b16 %v35
    %v75 = vunpack.c.l.b16 %v36
    %v76 = vunpack.c.l.b16 %v37
    %v77 = vunpack.c.l.b16 %v38
    %v78 = vunpack.c.l.b16 %v39
    %v79 = vunpack.c.l.b16 %v40
    %v80 = vunpack.c.l.b16 %v41
    %v81 = vunpack.c.l.b16 %v42
    %v82 = vunpack.c.l.b16 %v43
    %v83 = vunpack.c.l.b16 %v44
    %v84 = vunpack.c.l.b16 %v45
    %v85 = vunpack.c.l.b16 %v46
    %v86 = vunpack.c.l.b16 %v47
    %v87 = vunpack.c.l.b16 %v48
    %v88 = vpack.c.b16 %v73, %v72
    %v89 = vpack.c.b16 %v75, %v74
    %v90 = vpack.c.b16 %v77, %v76
    %v91 = vpack.c.b16 %v79, %v78
    %v92 = vpack.c.b16 %v81, %v80
    %v93 = vpack.c.b16 %v83, %v82
    %v94 = vpack.c.b16 %v85, %v84
    %v95 = vpack.c.b16 %v87, %v86
    %104 = vmatprep.subr.bf16.mxu0 0
    %105 = vmatpush1.bf16.msra.mxu0 %v88
    %106 = vmatprep.subr.bf16.mxu0 0
    %107 = vmatpush1.bf16.msra.mxu0 %v89
    %108 = vmatprep.subr.bf16.mxu0 0
    %109 = vmatpush1.bf16.msra.mxu0 %v90
    %110 = vmatprep.subr.bf16.mxu0 0
    %111 = vmatpush1.bf16.msra.mxu0 %v91
    %112 = vmatprep.subr.bf16.mxu0 0
    %113 = vmatpush1.bf16.msra.mxu0 %v92
    %114 = vmatprep.subr.bf16.mxu0 0
    %115 = vmatpush1.bf16.msra.mxu0 %v93
    %116 = vmatprep.subr.bf16.mxu0 0
    %117 = vmatpush1.bf16.msra.mxu0 %v94
    %118 = vmatprep.subr.bf16.mxu0 0
    %119 = vmatpush1.bf16.msra.mxu0 %v95
    %120 = vmatprep.subr.bf16.mxu0 0
    %121 = vmatpush1.bf16.msra.mxu0 0
    %122 = vmatprep.subr.bf16.mxu0 0
    %123 = vmatpush1.bf16.msra.mxu0 0
    %124 = vmatprep.subr.bf16.mxu0 0
    %125 = vmatpush1.bf16.msra.mxu0 0
    %126 = vmatprep.subr.bf16.mxu0 0
    %127 = vmatpush1.bf16.msra.mxu0 0
    %128 = vmatprep.subr.bf16.mxu0 0
    %129 = vmatpush1.bf16.msra.mxu0 0
    %130 = vmatprep.subr.bf16.mxu0 0
    %131 = vmatpush1.bf16.msra.mxu0 0
    %132 = vmatprep.subr.bf16.mxu0 0
    %133 = vmatpush1.bf16.msra.mxu0 0
    %134 = vmatprep.subr.bf16.mxu0 0
    %135 = vmatpush1.bf16.msra.mxu0 0
    %136 = vmatprep.mubr.bf16.mxu0 0
    %137 = vmatmul.mubr.bf16.gmra.mrb[0].mxu0 %v32
    %v138 = vpop.f32.mrb[0].mxu0
    %v139 = vadd.f32 %v54, %v138
    %v140 = vpop.f32.mrb[0].mxu0
    %v141 = vpop.f32.mrb[0].mxu0
    %v142 = vpop.f32.mrb[0].mxu0
    %143 = vdwg.mxu0
    %vm144 = vcmp.gt.f32.partialorder %v139, 0.0
    %v145 = vmul.f32 %v139, 0.01
    %v146 = vsel %vm144, %v139, %v145
    %v147 = vld [vmem:[%s1] sm:$0xf]
    %v148 = vunpack.c.l.bf16 %v147
    %v149 = vadd.f32 %v146, %v148
    %v150 = vpack.c.bf16 %v149, %v149
    %s151 = scalar_lea.vmem [#allocation2], 64
    %v152 = vld [vmem:[%s151] sm:$0xf]
    %v153 = vld [vmem:[%s151 + $0x4] sm:$0xf]
    %v154 = vld [vmem:[%s151 + $0x8] sm:$0xf]
    %v155 = vld [vmem:[%s151 + $0xc] sm:$0xf]
    %v156 = vld [vmem:[%s151 + $0x10] sm:$0xf]
    %v157 = vld [vmem:[%s151 + $0x14] sm:$0xf]
    %v158 = vld [vmem:[%s151 + $0x18] sm:$0xf]
    %v159 = vld [vmem:[%s151 + $0x1c] sm:$0xf]
    %v160 = vld [vmem:[%s151 + $0x20] sm:$0xf]
    %v161 = vld [vmem:[%s151 + $0x24] sm:$0xf]
    %v162 = vld [vmem:[%s151 + $0x28] sm:$0xf]
    %v163 = vld [vmem:[%s151 + $0x2c] sm:$0xf]
    %v164 = vld [vmem:[%s151 + $0x30] sm:$0xf]
    %v165 = vld [vmem:[%s151 + $0x34] sm:$0xf]
    %v166 = vld [vmem:[%s151 + $0x38] sm:$0xf]
    %v167 = vld [vmem:[%s151 + $0x3c] sm:$0xf]
    %s168 = scalar_lea.vmem %s3, 1
    %v169 = vld [vmem:[%s168] sm:$0x1]
    %v171 = vlaneseq
    %v172 = vshrl.u32 %v171, 7
    %v173 = vsub.s32 0, %v172
    %v174 = vrot.slane %v169, %v173
    %v192 = vunpack.c.l.b16 %v152
    %v193 = vunpack.c.l.b16 %v153
    %v194 = vunpack.c.l.b16 %v154
    %v195 = vunpack.c.l.b16 %v155
    %v196 = vunpack.c.l.b16 %v156
    %v197 = vunpack.c.l.b16 %v157
    %v198 = vunpack.c.l.b16 %v158
    %v199 = vunpack.c.l.b16 %v159
    %v200 = vunpack.c.l.b16 %v160
    %v201 = vunpack.c.l.b16 %v161
    %v202 = vunpack.c.l.b16 %v162
    %v203 = vunpack.c.l.b16 %v163
    %v204 = vunpack.c.l.b16 %v164
    %v205 = vunpack.c.l.b16 %v165
    %v206 = vunpack.c.l.b16 %v166
    %v207 = vunpack.c.l.b16 %v167
    %v208 = vpack.c.b16 %v193, %v192
    %v209 = vpack.c.b16 %v195, %v194
    %v210 = vpack.c.b16 %v197, %v196
    %v211 = vpack.c.b16 %v199, %v198
    %v212 = vpack.c.b16 %v201, %v200
    %v213 = vpack.c.b16 %v203, %v202
    %v214 = vpack.c.b16 %v205, %v204
    %v215 = vpack.c.b16 %v207, %v206
    %224 = vmatprep.subr.bf16.mxu0 0
    %225 = vmatpush1.bf16.msra.mxu0 %v208
    %226 = vmatprep.subr.bf16.mxu0 0
    %227 = vmatpush1.bf16.msra.mxu0 %v209
    %228 = vmatprep.subr.bf16.mxu0 0
    %229 = vmatpush1.bf16.msra.mxu0 %v210
    %230 = vmatprep.subr.bf16.mxu0 0
    %231 = vmatpush1.bf16.msra.mxu0 %v211
    %232 = vmatprep.subr.bf16.mxu0 0
    %233 = vmatpush1.bf16.msra.mxu0 %v212
    %234 = vmatprep.subr.bf16.mxu0 0
    %235 = vmatpush1.bf16.msra.mxu0 %v213
    %236 = vmatprep.subr.bf16.mxu0 0
    %237 = vmatpush1.bf16.msra.mxu0 %v214
    %238 = vmatprep.subr.bf16.mxu0 0
    %239 = vmatpush1.bf16.msra.mxu0 %v215
    %240 = vmatprep.subr.bf16.mxu0 0
    %241 = vmatpush1.bf16.msra.mxu0 0
    %242 = vmatprep.subr.bf16.mxu0 0
    %243 = vmatpush1.bf16.msra.mxu0 0
    %244 = vmatprep.subr.bf16.mxu0 0
    %245 = vmatpush1.bf16.msra.mxu0 0
    %246 = vmatprep.subr.bf16.mxu0 0
    %247 = vmatpush1.bf16.msra.mxu0 0
    %248 = vmatprep.subr.bf16.mxu0 0
    %249 = vmatpush1.bf16.msra.mxu0 0
    %250 = vmatprep.subr.bf16.mxu0 0
    %251 = vmatpush1.bf16.msra.mxu0 0
    %252 = vmatprep.subr.bf16.mxu0 0
    %253 = vmatpush1.bf16.msra.mxu0 0
    %254 = vmatprep.subr.bf16.mxu0 0
    %255 = vmatpush1.bf16.msra.mxu0 0
    %256 = vmatprep.mubr.bf16.mxu0 0
    %257 = vmatmul.mubr.bf16.gmra.mrb[0].mxu0 %v150
    %v258 = vpop.f32.mrb[0].mxu0
    %v259 = vadd.f32 %v174, %v258
    %v260 = vpop.f32.mrb[0].mxu0
    %v261 = vpop.f32.mrb[0].mxu0
    %v262 = vpop.f32.mrb[0].mxu0
    %263 = vdwg.mxu0
    %vm264 = vcmp.gt.f32.partialorder %v259, 0.0
    %v265 = vmul.f32 %v259, 0.01
    %v266 = vsel %vm264, %v259, %v265
    %v267 = vpack.c.bf16 %v266, %v266
    %s268 = scalar_lea.vmem [#allocation2], 128
    %v269 = vld [vmem:[%s268] sm:$0xf]
    %v270 = vld [vmem:[%s268 + $0x4] sm:$0xf]
    %v271 = vld [vmem:[%s268 + $0x8] sm:$0xf]
    %v272 = vld [vmem:[%s268 + $0xc] sm:$0xf]
    %v273 = vld [vmem:[%s268 + $0x10] sm:$0xf]
    %v274 = vld [vmem:[%s268 + $0x14] sm:$0xf]
    %v275 = vld [vmem:[%s268 + $0x18] sm:$0xf]
    %v276 = vld [vmem:[%s268 + $0x1c] sm:$0xf]
    %v277 = vld [vmem:[%s268 + $0x20] sm:$0xf]
    %v278 = vld [vmem:[%s268 + $0x24] sm:$0xf]
    %v279 = vld [vmem:[%s268 + $0x28] sm:$0xf]
    %v280 = vld [vmem:[%s268 + $0x2c] sm:$0xf]
    %v281 = vld [vmem:[%s268 + $0x30] sm:$0xf]
    %v282 = vld [vmem:[%s268 + $0x34] sm:$0xf]
    %v283 = vld [vmem:[%s268 + $0x38] sm:$0xf]
    %v284 = vld [vmem:[%s268 + $0x3c] sm:$0xf]
    %s285 = scalar_lea.vmem %s3, 2
    %v286 = vld [vmem:[%s285] sm:$0x1]
    %v288 = vlaneseq
    %v289 = vshrl.u32 %v288, 7
    %v290 = vsub.s32 0, %v289
    %v291 = vrot.slane %v286, %v290
    %v309 = vunpack.c.l.b16 %v269
    %v310 = vunpack.c.l.b16 %v270
    %v311 = vunpack.c.l.b16 %v271
    %v312 = vunpack.c.l.b16 %v272
    %v313 = vunpack.c.l.b16 %v273
    %v314 = vunpack.c.l.b16 %v274
    %v315 = vunpack.c.l.b16 %v275
    %v316 = vunpack.c.l.b16 %v276
    %v317 = vunpack.c.l.b16 %v277
    %v318 = vunpack.c.l.b16 %v278
    %v319 = vunpack.c.l.b16 %v279
    %v320 = vunpack.c.l.b16 %v280
    %v321 = vunpack.c.l.b16 %v281
    %v322 = vunpack.c.l.b16 %v282
    %v323 = vunpack.c.l.b16 %v283
    %v324 = vunpack.c.l.b16 %v284
    %v325 = vpack.c.b16 %v310, %v309
    %v326 = vpack.c.b16 %v312, %v311
    %v327 = vpack.c.b16 %v314, %v313
    %v328 = vpack.c.b16 %v316, %v315
    %v329 = vpack.c.b16 %v318, %v317
    %v330 = vpack.c.b16 %v320, %v319
    %v331 = vpack.c.b16 %v322, %v321
    %v332 = vpack.c.b16 %v324, %v323
    %341 = vmatprep.subr.bf16.mxu0 0
    %342 = vmatpush1.bf16.msra.mxu0 %v325
    %343 = vmatprep.subr.bf16.mxu0 0
    %344 = vmatpush1.bf16.msra.mxu0 %v326
    %345 = vmatprep.subr.bf16.mxu0 0
    %346 = vmatpush1.bf16.msra.mxu0 %v327
    %347 = vmatprep.subr.bf16.mxu0 0
    %348 = vmatpush1.bf16.msra.mxu0 %v328
    %349 = vmatprep.subr.bf16.mxu0 0
    %350 = vmatpush1.bf16.msra.mxu0 %v329
    %351 = vmatprep.subr.bf16.mxu0 0
    %352 = vmatpush1.bf16.msra.mxu0 %v330
    %353 = vmatprep.subr.bf16.mxu0 0
    %354 = vmatpush1.bf16.msra.mxu0 %v331
    %355 = vmatprep.subr.bf16.mxu0 0
    %356 = vmatpush1.bf16.msra.mxu0 %v332
    %357 = vmatprep.subr.bf16.mxu0 0
    %358 = vmatpush1.bf16.msra.mxu0 0
    %359 = vmatprep.subr.bf16.mxu0 0
    %360 = vmatpush1.bf16.msra.mxu0 0
    %361 = vmatprep.subr.bf16.mxu0 0
    %362 = vmatpush1.bf16.msra.mxu0 0
    %363 = vmatprep.subr.bf16.mxu0 0
    %364 = vmatpush1.bf16.msra.mxu0 0
    %365 = vmatprep.subr.bf16.mxu0 0
    %366 = vmatpush1.bf16.msra.mxu0 0
    %367 = vmatprep.subr.bf16.mxu0 0
    %368 = vmatpush1.bf16.msra.mxu0 0
    %369 = vmatprep.subr.bf16.mxu0 0
    %370 = vmatpush1.bf16.msra.mxu0 0
    %371 = vmatprep.subr.bf16.mxu0 0
    %372 = vmatpush1.bf16.msra.mxu0 0
    %373 = vmatprep.mubr.bf16.mxu0 0
    %374 = vmatmul.mubr.bf16.gmra.mrb[0].mxu0 %v267
    %v375 = vpop.f32.mrb[0].mxu0
    %v376 = vadd.f32 %v291, %v375
    %v377 = vpop.f32.mrb[0].mxu0
    %v378 = vpop.f32.mrb[0].mxu0
    %v379 = vpop.f32.mrb[0].mxu0
    %380 = vdwg.mxu0
    %vm381 = vcmp.gt.f32.partialorder %v376, 0.0
    %v382 = vmul.f32 %v376, 0.01
    %v383 = vsel %vm381, %v376, %v382
    %v384 = vpack.c.bf16 %v383, %v383
    %s385 = scalar_lea.vmem [#allocation2], 192
    %v386 = vld [vmem:[%s385] sm:$0xf]
    %v387 = vld [vmem:[%s385 + $0x4] sm:$0xf]
    %v388 = vld [vmem:[%s385 + $0x8] sm:$0xf]
    %v389 = vld [vmem:[%s385 + $0xc] sm:$0xf]
    %v390 = vld [vmem:[%s385 + $0x10] sm:$0xf]
    %v391 = vld [vmem:[%s385 + $0x14] sm:$0xf]
    %v392 = vld [vmem:[%s385 + $0x18] sm:$0xf]
    %v393 = vld [vmem:[%s385 + $0x1c] sm:$0xf]
    %v394 = vld [vmem:[%s385 + $0x20] sm:$0xf]
    %v395 = vld [vmem:[%s385 + $0x24] sm:$0xf]
    %v396 = vld [vmem:[%s385 + $0x28] sm:$0xf]
    %v397 = vld [vmem:[%s385 + $0x2c] sm:$0xf]
    %v398 = vld [vmem:[%s385 + $0x30] sm:$0xf]
    %v399 = vld [vmem:[%s385 + $0x34] sm:$0xf]
    %v400 = vld [vmem:[%s385 + $0x38] sm:$0xf]
    %v401 = vld [vmem:[%s385 + $0x3c] sm:$0xf]
    %s402 = scalar_lea.vmem %s3, 3
    %v403 = vld [vmem:[%s402] sm:$0x1]
    %v405 = vlaneseq
    %v406 = vshrl.u32 %v405, 7
    %v407 = vsub.s32 0, %v406
    %v408 = vrot.slane %v403, %v407
    %v426 = vunpack.c.l.b16 %v386
    %v427 = vunpack.c.l.b16 %v387
    %v428 = vunpack.c.l.b16 %v388
    %v429 = vunpack.c.l.b16 %v389
    %v430 = vunpack.c.l.b16 %v390
    %v431 = vunpack.c.l.b16 %v391
    %v432 = vunpack.c.l.b16 %v392
    %v433 = vunpack.c.l.b16 %v393
    %v434 = vunpack.c.l.b16 %v394
    %v435 = vunpack.c.l.b16 %v395
    %v436 = vunpack.c.l.b16 %v396
    %v437 = vunpack.c.l.b16 %v397
    %v438 = vunpack.c.l.b16 %v398
    %v439 = vunpack.c.l.b16 %v399
    %v440 = vunpack.c.l.b16 %v400
    %v441 = vunpack.c.l.b16 %v401
    %v442 = vpack.c.b16 %v427, %v426
    %v443 = vpack.c.b16 %v429, %v428
    %v444 = vpack.c.b16 %v431, %v430
    %v445 = vpack.c.b16 %v433, %v432
    %v446 = vpack.c.b16 %v435, %v434
    %v447 = vpack.c.b16 %v437, %v436
    %v448 = vpack.c.b16 %v439, %v438
    %v449 = vpack.c.b16 %v441, %v440
    %458 = vmatprep.subr.bf16.mxu0 0
    %459 = vmatpush1.bf16.msra.mxu0 %v442
    %460 = vmatprep.subr.bf16.mxu0 0
    %461 = vmatpush1.bf16.msra.mxu0 %v443
    %462 = vmatprep.subr.bf16.mxu0 0
    %463 = vmatpush1.bf16.msra.mxu0 %v444
    %464 = vmatprep.subr.bf16.mxu0 0
    %465 = vmatpush1.bf16.msra.mxu0 %v445
    %466 = vmatprep.subr.bf16.mxu0 0
    %467 = vmatpush1.bf16.msra.mxu0 %v446
    %468 = vmatprep.subr.bf16.mxu0 0
    %469 = vmatpush1.bf16.msra.mxu0 %v447
    %470 = vmatprep.subr.bf16.mxu0 0
    %471 = vmatpush1.bf16.msra.mxu0 %v448
    %472 = vmatprep.subr.bf16.mxu0 0
    %473 = vmatpush1.bf16.msra.mxu0 %v449
    %474 = vmatprep.subr.bf16.mxu0 0
    %475 = vmatpush1.bf16.msra.mxu0 0
    %476 = vmatprep.subr.bf16.mxu0 0
    %477 = vmatpush1.bf16.msra.mxu0 0
    %478 = vmatprep.subr.bf16.mxu0 0
    %479 = vmatpush1.bf16.msra.mxu0 0
    %480 = vmatprep.subr.bf16.mxu0 0
    %481 = vmatpush1.bf16.msra.mxu0 0
    %482 = vmatprep.subr.bf16.mxu0 0
    %483 = vmatpush1.bf16.msra.mxu0 0
    %484 = vmatprep.subr.bf16.mxu0 0
    %485 = vmatpush1.bf16.msra.mxu0 0
    %486 = vmatprep.subr.bf16.mxu0 0
    %487 = vmatpush1.bf16.msra.mxu0 0
    %488 = vmatprep.subr.bf16.mxu0 0
    %489 = vmatpush1.bf16.msra.mxu0 0
    %490 = vmatprep.mubr.bf16.mxu0 0
    %491 = vmatmul.mubr.bf16.gmra.mrb[0].mxu0 %v384
    %v492 = vpop.f32.mrb[0].mxu0
    %v493 = vadd.f32 %v408, %v492
    %v494 = vpop.f32.mrb[0].mxu0
    %v495 = vpop.f32.mrb[0].mxu0
    %v496 = vpop.f32.mrb[0].mxu0
    %497 = vdwg.mxu0
    %vm498 = vcmp.gt.f32.partialorder %v493, 0.0
    %v499 = vmul.f32 %v493, 0.01
    %v500 = vsel %vm498, %v493, %v499
    %v501 = vpack.c.bf16 %v500, %v500
    %s502 = scalar_lea.vmem [#allocation2], 256
    %v503 = vld [vmem:[%s502] sm:$0xf]
    %v504 = vld [vmem:[%s502 + $0x4] sm:$0xf]
    %v505 = vld [vmem:[%s502 + $0x8] sm:$0xf]
    %v506 = vld [vmem:[%s502 + $0xc] sm:$0xf]
    %v507 = vld [vmem:[%s502 + $0x10] sm:$0xf]
    %v508 = vld [vmem:[%s502 + $0x14] sm:$0xf]
    %v509 = vld [vmem:[%s502 + $0x18] sm:$0xf]
    %v510 = vld [vmem:[%s502 + $0x1c] sm:$0xf]
    %v511 = vld [vmem:[%s502 + $0x20] sm:$0xf]
    %v512 = vld [vmem:[%s502 + $0x24] sm:$0xf]
    %v513 = vld [vmem:[%s502 + $0x28] sm:$0xf]
    %v514 = vld [vmem:[%s502 + $0x2c] sm:$0xf]
    %v515 = vld [vmem:[%s502 + $0x30] sm:$0xf]
    %v516 = vld [vmem:[%s502 + $0x34] sm:$0xf]
    %v517 = vld [vmem:[%s502 + $0x38] sm:$0xf]
    %v518 = vld [vmem:[%s502 + $0x3c] sm:$0xf]
    %s519 = scalar_lea.vmem %s3, 4
    %v520 = vld [vmem:[%s519] sm:$0x1]
    %v522 = vlaneseq
    %v523 = vshrl.u32 %v522, 7
    %v524 = vsub.s32 0, %v523
    %v525 = vrot.slane %v520, %v524
    %v543 = vunpack.c.l.b16 %v503
    %v544 = vunpack.c.l.b16 %v504
    %v545 = vunpack.c.l.b16 %v505
    %v546 = vunpack.c.l.b16 %v506
    %v547 = vunpack.c.l.b16 %v507
    %v548 = vunpack.c.l.b16 %v508
    %v549 = vunpack.c.l.b16 %v509
    %v550 = vunpack.c.l.b16 %v510
    %v551 = vunpack.c.l.b16 %v511
    %v552 = vunpack.c.l.b16 %v512
    %v553 = vunpack.c.l.b16 %v513
    %v554 = vunpack.c.l.b16 %v514
    %v555 = vunpack.c.l.b16 %v515
    %v556 = vunpack.c.l.b16 %v516
    %v557 = vunpack.c.l.b16 %v517
    %v558 = vunpack.c.l.b16 %v518
    %v559 = vpack.c.b16 %v544, %v543
    %v560 = vpack.c.b16 %v546, %v545
    %v561 = vpack.c.b16 %v548, %v547
    %v562 = vpack.c.b16 %v550, %v549
    %v563 = vpack.c.b16 %v552, %v551
    %v564 = vpack.c.b16 %v554, %v553
    %v565 = vpack.c.b16 %v556, %v555
    %v566 = vpack.c.b16 %v558, %v557
    %575 = vmatprep.subr.bf16.mxu0 0
    %576 = vmatpush1.bf16.msra.mxu0 %v559
    %577 = vmatprep.subr.bf16.mxu0 0
    %578 = vmatpush1.bf16.msra.mxu0 %v560
    %579 = vmatprep.subr.bf16.mxu0 0
    %580 = vmatpush1.bf16.msra.mxu0 %v561
    %581 = vmatprep.subr.bf16.mxu0 0
    %582 = vmatpush1.bf16.msra.mxu0 %v562
    %583 = vmatprep.subr.bf16.mxu0 0
    %584 = vmatpush1.bf16.msra.mxu0 %v563
    %585 = vmatprep.subr.bf16.mxu0 0
    %586 = vmatpush1.bf16.msra.mxu0 %v564
    %587 = vmatprep.subr.bf16.mxu0 0
    %588 = vmatpush1.bf16.msra.mxu0 %v565
    %589 = vmatprep.subr.bf16.mxu0 0
    %590 = vmatpush1.bf16.msra.mxu0 %v566
    %591 = vmatprep.subr.bf16.mxu0 0
    %592 = vmatpush1.bf16.msra.mxu0 0
    %593 = vmatprep.subr.bf16.mxu0 0
    %594 = vmatpush1.bf16.msra.mxu0 0
    %595 = vmatprep.subr.bf16.mxu0 0
    %596 = vmatpush1.bf16.msra.mxu0 0
    %597 = vmatprep.subr.bf16.mxu0 0
    %598 = vmatpush1.bf16.msra.mxu0 0
    %599 = vmatprep.subr.bf16.mxu0 0
    %600 = vmatpush1.bf16.msra.mxu0 0
    %601 = vmatprep.subr.bf16.mxu0 0
    %602 = vmatpush1.bf16.msra.mxu0 0
    %603 = vmatprep.subr.bf16.mxu0 0
    %604 = vmatpush1.bf16.msra.mxu0 0
    %605 = vmatprep.subr.bf16.mxu0 0
    %606 = vmatpush1.bf16.msra.mxu0 0
    %607 = vmatprep.mubr.bf16.mxu0 0
    %608 = vmatmul.mubr.bf16.gmra.mrb[0].mxu0 %v501
    %v609 = vpop.f32.mrb[0].mxu0
    %v610 = vadd.f32 %v525, %v609
    %v611 = vpop.f32.mrb[0].mxu0
    %v612 = vpop.f32.mrb[0].mxu0
    %v613 = vpop.f32.mrb[0].mxu0
    %614 = vdwg.mxu0
    %vm615 = vcmp.gt.f32.partialorder %v610, 0.0
    %v616 = vmul.f32 %v610, 0.01
    %v617 = vsel %vm615, %v610, %v616
    %v618 = vpack.c.bf16 %v617, %v617
    %s619 = scalar_lea.vmem [#allocation2], 320
    %v620 = vld [vmem:[%s619] sm:$0xf]
    %v621 = vld [vmem:[%s619 + $0x4] sm:$0xf]
    %v622 = vld [vmem:[%s619 + $0x8] sm:$0xf]
    %v623 = vld [vmem:[%s619 + $0xc] sm:$0xf]
    %v624 = vld [vmem:[%s619 + $0x10] sm:$0xf]
    %v625 = vld [vmem:[%s619 + $0x14] sm:$0xf]
    %v626 = vld [vmem:[%s619 + $0x18] sm:$0xf]
    %v627 = vld [vmem:[%s619 + $0x1c] sm:$0xf]
    %v628 = vld [vmem:[%s619 + $0x20] sm:$0xf]
    %v629 = vld [vmem:[%s619 + $0x24] sm:$0xf]
    %v630 = vld [vmem:[%s619 + $0x28] sm:$0xf]
    %v631 = vld [vmem:[%s619 + $0x2c] sm:$0xf]
    %v632 = vld [vmem:[%s619 + $0x30] sm:$0xf]
    %v633 = vld [vmem:[%s619 + $0x34] sm:$0xf]
    %v634 = vld [vmem:[%s619 + $0x38] sm:$0xf]
    %v635 = vld [vmem:[%s619 + $0x3c] sm:$0xf]
    %s636 = scalar_lea.vmem %s3, 5
    %v637 = vld [vmem:[%s636] sm:$0x1]
    %v639 = vlaneseq
    %v640 = vshrl.u32 %v639, 7
    %v641 = vsub.s32 0, %v640
    %v642 = vrot.slane %v637, %v641
    %v660 = vunpack.c.l.b16 %v620
    %v661 = vunpack.c.l.b16 %v621
    %v662 = vunpack.c.l.b16 %v622
    %v663 = vunpack.c.l.b16 %v623
    %v664 = vunpack.c.l.b16 %v624
    %v665 = vunpack.c.l.b16 %v625
    %v666 = vunpack.c.l.b16 %v626
    %v667 = vunpack.c.l.b16 %v627
    %v668 = vunpack.c.l.b16 %v628
    %v669 = vunpack.c.l.b16 %v629
    %v670 = vunpack.c.l.b16 %v630
    %v671 = vunpack.c.l.b16 %v631
    %v672 = vunpack.c.l.b16 %v632
    %v673 = vunpack.c.l.b16 %v633
    %v674 = vunpack.c.l.b16 %v634
    %v675 = vunpack.c.l.b16 %v635
    %v676 = vpack.c.b16 %v661, %v660
    %v677 = vpack.c.b16 %v663, %v662
    %v678 = vpack.c.b16 %v665, %v664
    %v679 = vpack.c.b16 %v667, %v666
    %v680 = vpack.c.b16 %v669, %v668
    %v681 = vpack.c.b16 %v671, %v670
    %v682 = vpack.c.b16 %v673, %v672
    %v683 = vpack.c.b16 %v675, %v674
    %692 = vmatprep.subr.bf16.mxu0 0
    %693 = vmatpush1.bf16.msra.mxu0 %v676
    %694 = vmatprep.subr.bf16.mxu0 0
    %695 = vmatpush1.bf16.msra.mxu0 %v677
    %696 = vmatprep.subr.bf16.mxu0 0
    %697 = vmatpush1.bf16.msra.mxu0 %v678
    %698 = vmatprep.subr.bf16.mxu0 0
    %699 = vmatpush1.bf16.msra.mxu0 %v679
    %700 = vmatprep.subr.bf16.mxu0 0
    %701 = vmatpush1.bf16.msra.mxu0 %v680
    %702 = vmatprep.subr.bf16.mxu0 0
    %703 = vmatpush1.bf16.msra.mxu0 %v681
    %704 = vmatprep.subr.bf16.mxu0 0
    %705 = vmatpush1.bf16.msra.mxu0 %v682
    %706 = vmatprep.subr.bf16.mxu0 0
    %707 = vmatpush1.bf16.msra.mxu0 %v683
    %708 = vmatprep.subr.bf16.mxu0 0
    %709 = vmatpush1.bf16.msra.mxu0 0
    %710 = vmatprep.subr.bf16.mxu0 0
    %711 = vmatpush1.bf16.msra.mxu0 0
    %712 = vmatprep.subr.bf16.mxu0 0
    %713 = vmatpush1.bf16.msra.mxu0 0
    %714 = vmatprep.subr.bf16.mxu0 0
    %715 = vmatpush1.bf16.msra.mxu0 0
    %716 = vmatprep.subr.bf16.mxu0 0
    %717 = vmatpush1.bf16.msra.mxu0 0
    %718 = vmatprep.subr.bf16.mxu0 0
    %719 = vmatpush1.bf16.msra.mxu0 0
    %720 = vmatprep.subr.bf16.mxu0 0
    %721 = vmatpush1.bf16.msra.mxu0 0
    %722 = vmatprep.subr.bf16.mxu0 0
    %723 = vmatpush1.bf16.msra.mxu0 0
    %724 = vmatprep.mubr.bf16.mxu0 0
    %725 = vmatmul.mubr.bf16.gmra.mrb[0].mxu0 %v618
    %v726 = vpop.f32.mrb[0].mxu0
    %v727 = vadd.f32 %v642, %v726
    %v728 = vpop.f32.mrb[0].mxu0
    %v729 = vpop.f32.mrb[0].mxu0
    %v730 = vpop.f32.mrb[0].mxu0
    %731 = vdwg.mxu0
    %732 = vst [vmem:[%s4] sm:$0xff] %v727
    // Predicated region
    $region22: #{critic_forward.1} parent=1 // pred_check
      _
    $region23: #{critic_forward.1} parent=1 // pred_check_branch
      %734 = sbr.rel (0) target = $region25
    $region24: #{critic_forward.1} parent=1 // pred_region
      _
    $region25: #{critic_forward.1} parent=1 // pred_fallthru
      _
    // Predicated region
    $region26: #{critic_forward.1} parent=1 // pred_check
      _
    $region27: #{critic_forward.1} parent=1 // pred_check_branch
      %736 = sbr.rel (0) target = $region29
    $region28: #{critic_forward.1} parent=1 // pred_region
      _
    $region29: #{critic_forward.1} parent=1 // pred_fallthru
      _
    %737 = vsyncpa [#allocation3], 1

</llo_original>
